<compile_context>
chip_gen: v7x
topology: tpu7x:2x2x1
jax: 0.10.0
libtpu: 0.0.40
codegen_flags: <defaults>
</compile_context>

<pallas_src>
import functools

import numpy as np
import jax
import jax.numpy as jnp
from jax.experimental import pallas as pl
from jax.experimental.pallas import tpu as pltpu

EPS = 1e-6


def _round_up(x, m):
    return (x + m - 1) // m * m


def _pick_tile(n, max_tile):
    """Pick a tile (multiple of 128, <= max_tile) and pad n UP to tile * nblocks.

    Pads up instead of shrinking the tile, avoiding the 128-tile regime that only
    reaches ~30-60% of the HBM roofline.
    """
    n128 = max(_round_up(n, 128), 128)
    nblocks = -(-n128 // max_tile)
    tile = _round_up(-(-n128 // nblocks), 128)
    return tile, tile * nblocks


# ----------------------------------------------------------------------------
# Pallas kernel 1: tiled pairwise L2 distance matrix (+eps per element),
# emitted directly as pd^T.
#   pd[i, j]   = sqrt(sq_i + sq_j - 2 G_ij + 2*eps*(rs_i - rs_j) + D*eps^2)
#   pdt[a, b]  = pd[b, a] = sqrt(term_r[a] + term_c[b] - 2 G_ab + D*eps^2)
#     term_r[a] = sq_a - 2*eps*rs_a   (indexed by the pdt ROW)
#     term_c[b] = sq_b + 2*eps*rs_b   (indexed by the pdt COLUMN)
# The Gram tile is accumulated straight into the resident f32 output block.
# ----------------------------------------------------------------------------
def _pairwise_kernel(x_row_ref, x_col_ref, term_r_ref, term_c_ref, pdt_ref, *, d_orig):
    k = pl.program_id(2)

    @pl.when(k == 0)
    def _():
        pdt_ref[...] = jnp.zeros_like(pdt_ref)

    # MXU: accumulate into the output block (its index map ignores k, so it stays
    # resident in VMEM across the whole k loop -> no acc scratch, no extra copy).
    pdt_ref[...] += jax.lax.dot_general(
        x_row_ref[...], x_col_ref[...],
        dimension_numbers=(((1,), (1,)), ((), ())),
        preferred_element_type=jnp.float32)

    @pl.when(k == pl.num_programs(2) - 1)
    def _():
        d2 = (term_r_ref[...] + term_c_ref[...] - 2.0 * pdt_ref[...]
              + jnp.float32(d_orig) * (EPS * EPS))
        pdt_ref[...] = jnp.sqrt(jnp.maximum(d2, 0.0))


def pairwise_distance(emb, *, max_tile=512, max_tk=512, feed_dtype=jnp.bfloat16):
    """Returns pd^T as a (B_pad, B_pad) f32 matrix with pdt[c, i] == pd[i, c].

    pd itself is recovered on the host as pdt.T (exact; the eps asymmetry is stored).
    """
    B, D = emb.shape
    tile, B_pad = _pick_tile(B, max_tile)
    tk, D_pad = _pick_tile(D, max_tk)

    # Zero-pad.  Padded feature columns contribute nothing to gram / sq / rs; the
    # D*eps^2 term uses the ORIGINAL D, so padding is exact.
    x32 = jnp.zeros((B_pad, D_pad), jnp.float32).at[:B, :D].set(emb.astype(jnp.float32))
    x_feed = x32.astype(feed_dtype)
    if np.dtype(feed_dtype) != np.dtype(np.float32):
        # Keep sq/rs consistent with what the MXU actually multiplies so the
        # diagonal / near-duplicate cancellation stays (almost) exact.
        x32 = x_feed.astype(jnp.float32)
    sq = jnp.sum(x32 * x32, axis=1)     # hoisted once: (B_pad,)
    rs = jnp.sum(x32, axis=1)           # hoisted once: (B_pad,)
    term_r = (sq - 2.0 * EPS * rs)[:, None]     # (B_pad, 1): pdt rows
    term_c = (sq + 2.0 * EPS * rs)[None, :]     # (1, B_pad): pdt cols

    grid = (B_pad // tile, B_pad // tile, D_pad // tk)

    # Explicit VMEM budget: v7x has 64 MiB physical / 32 MiB default scoped.
    feed_bytes = np.dtype(feed_dtype).itemsize
    vmem_est = (2 * 2 * tile * tk * feed_bytes   # two x inputs, double-buffered
                + 2 * tile * tile * 4            # output block, double-buffered
                + 4 * tile * 4)                  # term vectors (tiny)
    vmem_limit = int(min(max(2 * vmem_est, 32 * 1024 * 1024), 40 * 1024 * 1024))

    kernel = functools.partial(_pairwise_kernel, d_orig=D)
    pdt = pl.pallas_call(
        kernel,
        grid_spec=pltpu.PrefetchScalarGridSpec(
            num_scalar_prefetch=0,
            grid=grid,
            in_specs=[
                pl.BlockSpec((tile, tk), lambda i, j, k: (i, k)),   # x rows -> pdt rows
                pl.BlockSpec((tile, tk), lambda i, j, k: (j, k)),   # x rows -> pdt cols
                pl.BlockSpec((tile, 1), lambda i, j, k: (i, 0)),    # term_r
                pl.BlockSpec((1, tile), lambda i, j, k: (0, j)),    # term_c
            ],
            out_specs=pl.BlockSpec((tile, tile), lambda i, j, k: (i, j)),
        ),
        out_shape=jax.ShapeDtypeStruct((B_pad, B_pad), jnp.float32),
        compiler_params=pltpu.CompilerParams(
            dimension_semantics=("parallel", "parallel", "arbitrary"),
            vmem_limit_bytes=vmem_limit),
    )(x_feed, x_feed, term_r, term_c)
    return pdt


# ----------------------------------------------------------------------------
# Pallas kernel 2: facility energy + fixed cluster assignment, given centroid
# ids.  grid=(K,); chosen ids are scalar-prefetched into SMEM and drive a
# BlockSpec row gather of pd^T (one contiguous row per step).  Running
# min/argmin and the mask/constraint vectors are carried in VMEM scratch
# across grid steps.
# ----------------------------------------------------------------------------
def _facility_kernel(cid_ref, pdt_row_ref, energy_ref, pred_ref,
                     min_d_ref, arg_ref, mask_ref, cons_ref, *, b_valid):
    k = pl.program_id(0)
    nk = pl.num_programs(0)
    B_pad = pdt_row_ref.shape[-1]

    @pl.when(k == 0)
    def _():
        min_d_ref[...] = jnp.full_like(min_d_ref, jnp.inf)
        arg_ref[...] = jnp.zeros_like(arg_ref)
        mask_ref[...] = jnp.zeros_like(mask_ref)
        cons_ref[...] = jnp.zeros_like(cons_ref)

    c = cid_ref[k]                                  # centroid id for this step
    if pdt_row_ref.shape[0] == 1:
        d = pdt_row_ref[...]                        # (1, B_pad): d[0,i] = pd[i, c]
    else:                                           # slab fallback path
        d = pdt_row_ref[pl.ds(c % 8, 1), :]
    kf = k.astype(jnp.float32)

    better = d < min_d_ref[...]
    arg_ref[...] = jnp.where(better, kf, arg_ref[...])
    min_d_ref[...] = jnp.where(better, d, min_d_ref[...])

    col = jax.lax.broadcasted_iota(jnp.int32, (1, B_pad), 1)
    hit = col == c
    mask_ref[...] = jnp.where(hit, 1.0, mask_ref[...])
    cons_ref[...] = jnp.where(hit, kf, cons_ref[...])

    @pl.when(k == nk - 1)
    def _():
        valid = col < b_valid
        # compute_facility_energy: -sum_i min_k pd[i, c_k]   (scalar -> SMEM)
        energy_ref[0] = -jnp.sum(jnp.where(valid, min_d_ref[...], 0.0))
        # get_cluster_assignment: y_fixed = (1 - mask) * argmin + constraint
        pred_ref[...] = (1.0 - mask_ref[...]) * arg_ref[...] + cons_ref[...]


def _facility_pallas(pdt, chosen_ids, b_valid, *, element_gather):
    B_pad = pdt.shape[1]
    K = int(chosen_ids.shape[0])
    kernel = functools.partial(_facility_kernel, b_valid=b_valid)
    if element_gather:
        # One contiguous pd^T row per step: B_pad*4 bytes of HBM read per centroid.
        row_spec = pl.BlockSpec((pl.Element(1), B_pad), lambda k, cid: (cid[k], 0))
    else:
        # 8-row-aligned slab; the exact row is selected in-kernel (8x the HBM read).
        row_spec = pl.BlockSpec((8, B_pad), lambda k, cid: (cid[k] // 8, 0))
    return pl.pallas_call(
        kernel,
        grid_spec=pltpu.PrefetchScalarGridSpec(
            num_scalar_prefetch=1,
            grid=(K,),
            in_specs=[row_spec],
            out_specs=[
                pl.BlockSpec(memory_space=pltpu.MemorySpace.SMEM),     # scalar energy
                pl.BlockSpec((1, B_pad), lambda k, cid: (0, 0)),       # lane-dense preds
            ],
            scratch_shapes=[pltpu.VMEM((1, B_pad), jnp.float32)] * 4,
        ),
        out_shape=(jax.ShapeDtypeStruct((1,), jnp.float32),
                   jax.ShapeDtypeStruct((1, B_pad), jnp.float32)),
        compiler_params=pltpu.CompilerParams(dimension_semantics=("arbitrary",)),
    )(chosen_ids.astype(jnp.int32), pdt)


def facility_call(pdt, chosen_ids, b_valid):
    try:
        out = _facility_pallas(pdt, chosen_ids, b_valid, element_gather=True)
        out = jax.block_until_ready(out)
    except Exception:
        # Fallback: 8-row-aligned slab gather (known-good path) if Element-indexed
        # row gather is rejected by this jax/libtpu build.
        out = _facility_pallas(pdt, chosen_ids, b_valid, element_gather=False)
    energy, preds = out
    return energy[0], preds[0, :b_valid]


# ----------------------------------------------------------------------------
# Host-side glue (numpy): NMI, greedy loss-augmented facility location,
# ground-truth cluster score.  Sequential, data-dependent algorithms that
# consume the Pallas-computed pd matrix.
# ----------------------------------------------------------------------------
def nmi_score(labels, preds):
    """normalized_mutual_info_score (sklearn default: arithmetic mean)."""
    labels = np.asarray(labels).astype(np.int64)
    preds = np.asarray(preds).astype(np.int64)
    classes, li = np.unique(labels, return_inverse=True)
    clusters, pi = np.unique(preds, return_inverse=True)
    if classes.size == 1 and clusters.size == 1:
        return 1.0
    n = labels.size
    cont = np.zeros((classes.size, clusters.size), dtype=np.float64)
    np.add.at(cont, (li, pi), 1.0)                       # vectorized contingency
    pxy = cont / n
    px = pxy.sum(axis=1, keepdims=True)
    py = pxy.sum(axis=0, keepdims=True)
    outer = px @ py
    nz = pxy > 0
    mi = float(np.sum(pxy[nz] * (np.log(pxy[nz]) - np.log(outer[nz]))))
    h_x = -float(np.sum(px[px > 0] * np.log(px[px > 0])))
    h_y = -float(np.sum(py[py > 0] * np.log(py[py > 0])))
    if mi <= 0.0:
        return 0.0
    denom = max((h_x + h_y) / 2.0, np.finfo(np.float64).eps)
    return mi / denom


def get_cluster_assignment_np(pd, centroid_ids):
    B = pd.shape[0]
    cols = pd[:, list(centroid_ids)]                 # (B, K)
    preds = np.argmin(cols, axis=1).astype(np.float64)
    mask = np.zeros(B, dtype=np.float64)
    constraint = np.zeros(B, dtype=np.float64)
    for k, c in enumerate(centroid_ids):
        mask[c] = 1.0
        constraint[c] = float(k)
    return (1.0 - mask) * preds + constraint


def _find_loss_augmented_facility_idx(pd, labels, chosen, candidates, margin):
    nc = len(candidates)
    pd_cand = pd[:, candidates].T                    # (nc, B)
    if len(chosen) == 0:
        cand_scores = pd_cand.sum(axis=1)
    else:
        min_chosen = pd[:, chosen].min(axis=1)       # cached once per centroid round
        cand_scores = np.minimum(min_chosen[None, :], pd_cand).sum(axis=1)
    nmi_scores = np.zeros(nc, dtype=np.float64)
    for i, c in enumerate(candidates):
        ids = list(chosen) + [int(c)]
        preds = get_cluster_assignment_np(pd, ids)
        nmi_scores[i] = 1.0 - nmi_score(labels, preds)
    scores = cand_scores + margin * nmi_scores
    return int(candidates[int(np.argmax(scores))])


def compute_augmented_facility_locations(pd, labels, margin):
    num_classes = len(np.unique(np.asarray(labels)))
    chosen = []
    all_ids = list(range(pd.shape[0]))
    for _ in range(num_classes):
        candidates = [j for j in all_ids if j not in chosen]
        chosen.append(
            _find_loss_augmented_facility_idx(pd, labels, chosen, candidates, margin))
    return chosen


def compute_gt_cluster_score(pd, labels):
    labels = np.asarray(labels)
    score = 0.0
    for c in np.unique(labels):
        ids = np.where(labels == c)[0]
        sub = pd[np.ix_(ids, ids)]
        # reference does pairwise_distances_subset.sum(dim=0).min() (the extra [0]
        # in the torch code is a bug); we take the min of the column sums.
        score += -float(sub.sum(axis=0).min())
    return score


# ----------------------------------------------------------------------------
# Full forward pass of ClusteringLoss
# ----------------------------------------------------------------------------
def clustering_loss_forward(embedding, labels, margin):
    B = embedding.shape[0]
    pdt_full = pairwise_distance(embedding)                  # Pallas kernel 1 -> pd^T
    pd_np = np.asarray(pdt_full).T[:B, :B]                   # pd == pdt.T (exact)
    labels_np = np.asarray(labels)

    # TODO(synk): greedy loss-augmented centroid selection + NMI are sequential,
    # data-dependent host-side algorithms; kept in numpy glue (no Pallas form).
    chosen = compute_augmented_facility_locations(pd_np, labels_np, margin)
    chosen_ids = jnp.asarray(chosen, dtype=jnp.int32)

    score_pred, predictions = facility_call(pdt_full, chosen_ids, B)   # Pallas kernel 2
    clustering_score_pred = nmi_score(labels_np, np.asarray(predictions))
    score_gt = compute_gt_cluster_score(pd_np, labels_np)

    clustering_loss = jnp.maximum(
        score_pred + margin * (1.0 - clustering_score_pred) - score_gt, 0.0)
    return clustering_loss, 0, 0


if __name__ == "__main__":
    key = jax.random.PRNGKey(0)
    B, D = 8, 32
    embedding = jax.random.normal(key, (B, D), dtype=jnp.float32)
    label = jnp.array([0, 0, 1, 1, 0, 1, 0, 1], dtype=jnp.int32)

    # Light sanity check of the Pallas pairwise kernel against a direct numpy
    # reference (lenient tolerance: bf16 MXU feed).
    emb_np = np.asarray(embedding, dtype=np.float64)
    diff = emb_np[:, None, :] - emb_np[None, :, :] + EPS
    pd_ref = np.sqrt((diff * diff).sum(-1))
    pd_pallas = np.asarray(pairwise_distance(embedding)).T[:B, :B]
    np.testing.assert_allclose(pd_pallas, pd_ref, rtol=5e-2, atol=1e-1)

    loss, _, _ = clustering_loss_forward(embedding, label, margin=1.0)
    jax.block_until_ready(loss)
    assert np.isfinite(float(loss))
    print("KERNEL_OK")
</pallas_src>

<mosaic_0001>
module attributes {stable_mosaic.version = 11 : i64} {
  func.func @_pairwise_kernel(%arg0: i32, %arg1: i32, %arg2: i32, %arg3: memref<128x128xbf16, #tpu.memory_space<vmem>>, %arg4: memref<128x128xbf16, #tpu.memory_space<vmem>>, %arg5: memref<128x1xf32, #tpu.memory_space<vmem>>, %arg6: memref<1x128xf32, #tpu.memory_space<vmem>>, %arg7: memref<128x128xf32, #tpu.memory_space<vmem>>) attributes {dimension_semantics = [#tpu.dimension_semantics<parallel>, #tpu.dimension_semantics<parallel>, #tpu.dimension_semantics<arbitrary>], iteration_bounds = array<i64: 1, 1, 1>, scalar_prefetch = 0 : i64, scratch_operands = 0 : i64, tpu.core_type = #tpu.core_type<tc>, window_params = [{transform_indices = @transform_0, window_bounds = array<i64: 128, 128>}, {transform_indices = @transform_1, window_bounds = array<i64: 128, 128>}, {transform_indices = @transform_2, window_bounds = array<i64: 128, 1>}, {transform_indices = @transform_3, window_bounds = array<i64: 1, 128>}, {transform_indices = @transform_4, window_bounds = array<i64: 128, 128>}]} {
    %c0_i32 = arith.constant 0 : i32
    %0 = arith.cmpi eq, %arg2, %c0_i32 : i32
    %1 = arith.extui %0 : i1 to i32
    %c0_i32_0 = arith.constant 0 : i32
    %2 = arith.cmpi ne, %1, %c0_i32_0 : i32
    scf.if %2 {
      %cst_10 = arith.constant 0.000000e+00 : f32
      %12 = vector.broadcast %cst_10 : f32 to vector<128x128xf32>
      %c0_11 = arith.constant 0 : index
      %c0_12 = arith.constant 0 : index
      %13 = vector.load %arg7[%c0_11, %c0_12] : memref<128x128xf32, #tpu.memory_space<vmem>>, vector<128x128xf32>
      tpu.vector_store %arg7[%c0_11, %c0_12], %12 {strides = array<i32>} : memref<128x128xf32, #tpu.memory_space<vmem>>, vector<128x128xf32>,
    } else {
    }
    %c0 = arith.constant 0 : index
    %c0_1 = arith.constant 0 : index
    %3 = vector.load %arg7[%c0, %c0_1] : memref<128x128xf32, #tpu.memory_space<vmem>>, vector<128x128xf32>
    %c0_2 = arith.constant 0 : index
    %c0_3 = arith.constant 0 : index
    %4 = vector.load %arg3[%c0_2, %c0_3] : memref<128x128xbf16, #tpu.memory_space<vmem>>, vector<128x128xbf16>
    %c0_4 = arith.constant 0 : index
    %c0_5 = arith.constant 0 : index
    %5 = vector.load %arg4[%c0_4, %c0_5] : memref<128x128xbf16, #tpu.memory_space<vmem>>, vector<128x128xbf16>
    %cst = arith.constant dense<0.000000e+00> : vector<128x128xf32>
    %6 = tpu.matmul %4, %5, %cst {dimension_numbers = #tpu.dot_dimension_numbers<[1], [1], [0], [0], [0, 0, 1, 0], [], []>} : vector<128x128xbf16>, vector<128x128xbf16>, vector<128x128xf32> -> vector<128x128xf32>
    %7 = arith.addf %3, %6 : vector<128x128xf32>
    %c0_6 = arith.constant 0 : index
    %c0_7 = arith.constant 0 : index
    %8 = vector.load %arg7[%c0_6, %c0_7] : memref<128x128xf32, #tpu.memory_space<vmem>>, vector<128x128xf32>
    tpu.vector_store %arg7[%c0_6, %c0_7], %7 {strides = array<i32>} : memref<128x128xf32, #tpu.memory_space<vmem>>, vector<128x128xf32>,
    %c0_i32_8 = arith.constant 0 : i32
    %9 = arith.cmpi eq, %arg2, %c0_i32_8 : i32
    %10 = arith.extui %9 : i1 to i32
    %c0_i32_9 = arith.constant 0 : i32
    %11 = arith.cmpi ne, %10, %c0_i32_9 : i32
    scf.if %11 {
      %c0_10 = arith.constant 0 : index
      %c0_11 = arith.constant 0 : index
      %12 = vector.load %arg5[%c0_10, %c0_11] : memref<128x1xf32, #tpu.memory_space<vmem>>, vector<128x1xf32>
      %c0_12 = arith.constant 0 : index
      %c0_13 = arith.constant 0 : index
      %13 = vector.load %arg6[%c0_12, %c0_13] : memref<1x128xf32, #tpu.memory_space<vmem>>, vector<1x128xf32>
      %14 = vector.broadcast %12 : vector<128x1xf32> to vector<128x128xf32>
      %15 = vector.broadcast %13 : vector<1x128xf32> to vector<128x128xf32>
      %16 = arith.addf %14, %15 : vector<128x128xf32>
      %c0_14 = arith.constant 0 : index
      %c0_15 = arith.constant 0 : index
      %17 = vector.load %arg7[%c0_14, %c0_15] : memref<128x128xf32, #tpu.memory_space<vmem>>, vector<128x128xf32>
      %cst_16 = arith.constant 2.000000e+00 : f32
      %18 = vector.broadcast %cst_16 : f32 to vector<128x128xf32>
      %19 = arith.mulf %18, %17 : vector<128x128xf32>
      %20 = arith.subf %16, %19 : vector<128x128xf32>
      %cst_17 = arith.constant 3.200000e+01 : f32
      %cst_18 = arith.constant 9.99999996E-13 : f32
      %21 = arith.mulf %cst_17, %cst_18 : f32
      %22 = vector.broadcast %21 : f32 to vector<128x128xf32>
      %23 = arith.addf %20, %22 : vector<128x128xf32>
      %cst_19 = arith.constant 0.000000e+00 : f32
      %24 = vector.broadcast %cst_19 : f32 to vector<128x128xf32>
      %25 = arith.maximumf %23, %24 : vector<128x128xf32>
      %26 = math.sqrt %25 : vector<128x128xf32>
      %c0_20 = arith.constant 0 : index
      %c0_21 = arith.constant 0 : index
      %27 = vector.load %arg7[%c0_20, %c0_21] : memref<128x128xf32, #tpu.memory_space<vmem>>, vector<128x128xf32>
      tpu.vector_store %arg7[%c0_20, %c0_21], %26 {strides = array<i32>} : memref<128x128xf32, #tpu.memory_space<vmem>>, vector<128x128xf32>,
    } else {
    }
    return
  }
  func.func @transform_0(%arg0: i32, %arg1: i32, %arg2: i32) -> (i32, i32) {
    %c0_i32 = arith.constant 0 : i32
    return %arg0, %arg2 : i32, i32
  }
  func.func @transform_1(%arg0: i32, %arg1: i32, %arg2: i32) -> (i32, i32) {
    %c0_i32 = arith.constant 0 : i32
    return %arg1, %arg2 : i32, i32
  }
  func.func @transform_2(%arg0: i32, %arg1: i32, %arg2: i32) -> (i32, i32) {
    %c0_i32 = arith.constant 0 : i32
    %c0_i32_0 = arith.constant 0 : i32
    return %arg0, %c0_i32 : i32, i32
  }
  func.func @transform_3(%arg0: i32, %arg1: i32, %arg2: i32) -> (i32, i32) {
    %c0_i32 = arith.constant 0 : i32
    %c0_i32_0 = arith.constant 0 : i32
    return %c0_i32, %arg1 : i32, i32
  }
  func.func @transform_4(%arg0: i32, %arg1: i32, %arg2: i32) -> (i32, i32) {
    %c0_i32 = arith.constant 0 : i32
    return %arg0, %arg1 : i32, i32
  }
}

</mosaic_0001>

<llo_original>
// kernel: tpu_custom_call.1
$region0: #{tpu_custom_call.1}
  #allocation0 [shape = 'u32[]', space=smem, size = 0x4, offset = 0x4, fixed_abs, tag = 'smem constant byte address 0x4 - core index']
  #allocation1 [shape = 'u32[144,128]{1,0:T(1,128)}', space=vmem, size = 0x12000, scoped, tag = 'internal scratch']
  %s0 = inlined_call_operand.vmem [shape: bf16[128,128], index: 0, kind: input, shape index: {}]
  %s1 = inlined_call_operand.vmem [shape: bf16[128,128], index: 1, kind: input, shape index: {}]
  %s2 = inlined_call_operand.vmem [shape: f32[128,1], index: 2, kind: input, shape index: {}]
  %s3 = inlined_call_operand.vmem [shape: f32[1,128], index: 3, kind: input, shape index: {}]
  %s4 = inlined_call_operand.hbm [shape: f32[128,128], index: 4, kind: output, shape index: {}]
  %s5 = sld [smem:[#allocation0]]
  $region34: #{tpu_custom_call.1} parent=0
    _
  %s7 = ssub.s32 1, %s5
  %s8 = scalar_select 0, %s7, %s5
  $region1: #{tpu_custom_call.1} parent=0
    #allocation2 [shape = 'u8[65536]{0}', space=vmem, size = 0x10000, scoped, tag = 'output window, operand 0, single buffered']
    #allocation3 [shape = 's32[1]{0}', space=sflag, size = 0x4, scoped, tag = 'scoped memory for tpu_custom_call.1']
    %9 = vsyncpa [#allocation3], 0
    // Predicated region
    $region2: #{tpu_custom_call.1} parent=1 // pred_check
      _
    $region3: #{tpu_custom_call.1} parent=1 // pred_check_branch
      %11 = sbr.rel (0) target = $region5
    $region4: #{tpu_custom_call.1} parent=1 // pred_region
      _
    $region5: #{tpu_custom_call.1} parent=1 // pred_fallthru
      _
    // Predicated region
    $region6: #{tpu_custom_call.1} parent=1 // pred_check
      _
    $region7: #{tpu_custom_call.1} parent=1 // pred_check_branch
      %13 = sbr.rel (0) target = $region9
    $region8: #{tpu_custom_call.1} parent=1 // pred_region
      _
    $region9: #{tpu_custom_call.1} parent=1 // pred_fallthru
      _
    // Predicated region
    $region10: #{tpu_custom_call.1} parent=1 // pred_check
      _
    $region11: #{tpu_custom_call.1} parent=1 // pred_check_branch
      %15 = sbr.rel (0) target = $region13
    $region12: #{tpu_custom_call.1} parent=1 // pred_region
      _
    $region13: #{tpu_custom_call.1} parent=1 // pred_fallthru
      _
    // Predicated region
    $region14: #{tpu_custom_call.1} parent=1 // pred_check
      _
    $region15: #{tpu_custom_call.1} parent=1 // pred_check_branch
      %17 = sbr.rel (0) target = $region17
    $region16: #{tpu_custom_call.1} parent=1 // pred_region
      _
    $region17: #{tpu_custom_call.1} parent=1 // pred_fallthru
      _
    %p19 = scmp.eq.s32.totalorder 0, 0
    // Predicated region
    $region18: #{tpu_custom_call.1} parent=1 // pred_check
      %p20 = pneg %p19
    $region19: #{tpu_custom_call.1} parent=1 // pred_check_branch
      %22 = sbr.rel (%p20) target = $region21
    $region20: #{tpu_custom_call.1} parent=1 // pred_region
      %23 = vst [vmem:[#allocation2] sm:$0xff] 0.0
      %24 = vst [vmem:[#allocation2 + $0x8] sm:$0xff] 0.0
      %25 = vst [vmem:[#allocation2 + $0x10] sm:$0xff] 0.0
      %26 = vst [vmem:[#allocation2 + $0x18] sm:$0xff] 0.0
      %27 = vst [vmem:[#allocation2 + $0x20] sm:$0xff] 0.0
      %28 = vst [vmem:[#allocation2 + $0x28] sm:$0xff] 0.0
      %29 = vst [vmem:[#allocation2 + $0x30] sm:$0xff] 0.0
      %30 = vst [vmem:[#allocation2 + $0x38] sm:$0xff] 0.0
      %31 = vst [vmem:[#allocation2 + $0x40] sm:$0xff] 0.0
      %32 = vst [vmem:[#allocation2 + $0x48] sm:$0xff] 0.0
      %33 = vst [vmem:[#allocation2 + $0x50] sm:$0xff] 0.0
      %34 = vst [vmem:[#allocation2 + $0x58] sm:$0xff] 0.0
      %35 = vst [vmem:[#allocation2 + $0x60] sm:$0xff] 0.0
      %36 = vst [vmem:[#allocation2 + $0x68] sm:$0xff] 0.0
      %37 = vst [vmem:[#allocation2 + $0x70] sm:$0xff] 0.0
      %38 = vst [vmem:[#allocation2 + $0x78] sm:$0xff] 0.0
    $region21: #{tpu_custom_call.1} parent=1 // pred_fallthru
      _
    %v39 = vld [vmem:[#allocation2] sm:$0xff]
    %v40 = vld [vmem:[#allocation2 + $0x8] sm:$0xff]
    %v41 = vld [vmem:[#allocation2 + $0x10] sm:$0xff]
    %v42 = vld [vmem:[#allocation2 + $0x18] sm:$0xff]
    %v43 = vld [vmem:[#allocation2 + $0x20] sm:$0xff]
    %v44 = vld [vmem:[#allocation2 + $0x28] sm:$0xff]
    %v45 = vld [vmem:[#allocation2 + $0x30] sm:$0xff]
    %v46 = vld [vmem:[#allocation2 + $0x38] sm:$0xff]
    %v47 = vld [vmem:[#allocation2 + $0x40] sm:$0xff]
    %v48 = vld [vmem:[#allocation2 + $0x48] sm:$0xff]
    %v49 = vld [vmem:[#allocation2 + $0x50] sm:$0xff]
    %v50 = vld [vmem:[#allocation2 + $0x58] sm:$0xff]
    %v51 = vld [vmem:[#allocation2 + $0x60] sm:$0xff]
    %v52 = vld [vmem:[#allocation2 + $0x68] sm:$0xff]
    %v53 = vld [vmem:[#allocation2 + $0x70] sm:$0xff]
    %v54 = vld [vmem:[#allocation2 + $0x78] sm:$0xff]
    %v55 = vld [vmem:[%s0] sm:$0xf]
    %v56 = vld [vmem:[%s0 + $0x4] sm:$0xf]
    %v57 = vld [vmem:[%s0 + $0x8] sm:$0xf]
    %v58 = vld [vmem:[%s0 + $0xc] sm:$0xf]
    %v59 = vld [vmem:[%s0 + $0x10] sm:$0xf]
    %v60 = vld [vmem:[%s0 + $0x14] sm:$0xf]
    %v61 = vld [vmem:[%s0 + $0x18] sm:$0xf]
    %v62 = vld [vmem:[%s0 + $0x1c] sm:$0xf]
    %v63 = vld [vmem:[%s0 + $0x20] sm:$0xf]
    %v64 = vld [vmem:[%s0 + $0x24] sm:$0xf]
    %v65 = vld [vmem:[%s0 + $0x28] sm:$0xf]
    %v66 = vld [vmem:[%s0 + $0x2c] sm:$0xf]
    %v67 = vld [vmem:[%s0 + $0x30] sm:$0xf]
    %v68 = vld [vmem:[%s0 + $0x34] sm:$0xf]
    %v69 = vld [vmem:[%s0 + $0x38] sm:$0xf]
    %v70 = vld [vmem:[%s0 + $0x3c] sm:$0xf]
    %v71 = vld [vmem:[%s1] sm:$0xf]
    %v72 = vld [vmem:[%s1 + $0x4] sm:$0xf]
    %v73 = vld [vmem:[%s1 + $0x8] sm:$0xf]
    %v74 = vld [vmem:[%s1 + $0xc] sm:$0xf]
    %v75 = vld [vmem:[%s1 + $0x10] sm:$0xf]
    %v76 = vld [vmem:[%s1 + $0x14] sm:$0xf]
    %v77 = vld [vmem:[%s1 + $0x18] sm:$0xf]
    %v78 = vld [vmem:[%s1 + $0x1c] sm:$0xf]
    %v79 = vld [vmem:[%s1 + $0x20] sm:$0xf]
    %v80 = vld [vmem:[%s1 + $0x24] sm:$0xf]
    %v81 = vld [vmem:[%s1 + $0x28] sm:$0xf]
    %v82 = vld [vmem:[%s1 + $0x2c] sm:$0xf]
    %v83 = vld [vmem:[%s1 + $0x30] sm:$0xf]
    %v84 = vld [vmem:[%s1 + $0x34] sm:$0xf]
    %v85 = vld [vmem:[%s1 + $0x38] sm:$0xf]
    %v86 = vld [vmem:[%s1 + $0x3c] sm:$0xf]
    %v103 = vunpack.c.l.b16 %v55
    %v104 = vunpack.c.l.b16 %v56
    %v105 = vunpack.c.l.b16 %v57
    %v106 = vunpack.c.l.b16 %v58
    %v107 = vunpack.c.l.b16 %v59
    %v108 = vunpack.c.l.b16 %v60
    %v109 = vunpack.c.l.b16 %v61
    %v110 = vunpack.c.l.b16 %v62
    %v111 = vunpack.c.l.b16 %v63
    %v112 = vunpack.c.l.b16 %v64
    %v113 = vunpack.c.l.b16 %v65
    %v114 = vunpack.c.l.b16 %v66
    %v115 = vunpack.c.l.b16 %v67
    %v116 = vunpack.c.l.b16 %v68
    %v117 = vunpack.c.l.b16 %v69
    %v118 = vunpack.c.l.b16 %v70
    %v119 = vpack.c.b16 %v104, %v103
    %v120 = vpack.c.b16 %v106, %v105
    %v121 = vpack.c.b16 %v108, %v107
    %v122 = vpack.c.b16 %v110, %v109
    %v123 = vpack.c.b16 %v112, %v111
    %v124 = vpack.c.b16 %v114, %v113
    %v125 = vpack.c.b16 %v116, %v115
    %v126 = vpack.c.b16 %v118, %v117
    %v151 = vunpack.c.l.b16 %v71
    %v152 = vunpack.c.l.b16 %v72
    %v153 = vunpack.c.l.b16 %v73
    %v154 = vunpack.c.l.b16 %v74
    %v155 = vunpack.c.l.b16 %v75
    %v156 = vunpack.c.l.b16 %v76
    %v157 = vunpack.c.l.b16 %v77
    %v158 = vunpack.c.l.b16 %v78
    %v159 = vunpack.c.l.b16 %v79
    %v160 = vunpack.c.l.b16 %v80
    %v161 = vunpack.c.l.b16 %v81
    %v162 = vunpack.c.l.b16 %v82
    %v163 = vunpack.c.l.b16 %v83
    %v164 = vunpack.c.l.b16 %v84
    %v165 = vunpack.c.l.b16 %v85
    %v166 = vunpack.c.l.b16 %v86
    %v167 = vpack.c.b16 %v152, %v151
    %v168 = vpack.c.b16 %v154, %v153
    %v169 = vpack.c.b16 %v156, %v155
    %v170 = vpack.c.b16 %v158, %v157
    %v171 = vpack.c.b16 %v160, %v159
    %v172 = vpack.c.b16 %v162, %v161
    %v173 = vpack.c.b16 %v164, %v163
    %v174 = vpack.c.b16 %v166, %v165
    %183 = vmatprep.subr.bf16.mxu0 0
    %184 = vmatpush1.bf16.xpose.msra.mxu0 %v167
    %185 = vmatprep.subr.bf16.mxu0 0
    %186 = vmatpush1.bf16.xpose.msra.mxu0 %v168
    %187 = vmatprep.subr.bf16.mxu0 0
    %188 = vmatpush1.bf16.xpose.msra.mxu0 %v169
    %189 = vmatprep.subr.bf16.mxu0 0
    %190 = vmatpush1.bf16.xpose.msra.mxu0 %v170
    %191 = vmatprep.subr.bf16.mxu0 0
    %192 = vmatpush1.bf16.xpose.msra.mxu0 %v171
    %193 = vmatprep.subr.bf16.mxu0 0
    %194 = vmatpush1.bf16.xpose.msra.mxu0 %v172
    %195 = vmatprep.subr.bf16.mxu0 0
    %196 = vmatpush1.bf16.xpose.msra.mxu0 %v173
    %197 = vmatprep.subr.bf16.mxu0 0
    %198 = vmatpush1.bf16.xpose.msra.mxu0 %v174
    %199 = vmatprep.subr.bf16.mxu0 0
    %200 = vmatpush1.bf16.xpose.msra.mxu0 0
    %201 = vmatprep.subr.bf16.mxu0 0
    %202 = vmatpush1.bf16.xpose.msra.mxu0 0
    %203 = vmatprep.subr.bf16.mxu0 0
    %204 = vmatpush1.bf16.xpose.msra.mxu0 0
    %205 = vmatprep.subr.bf16.mxu0 0
    %206 = vmatpush1.bf16.xpose.msra.mxu0 0
    %207 = vmatprep.subr.bf16.mxu0 0
    %208 = vmatpush1.bf16.xpose.msra.mxu0 0
    %209 = vmatprep.subr.bf16.mxu0 0
    %210 = vmatpush1.bf16.xpose.msra.mxu0 0
    %211 = vmatprep.subr.bf16.mxu0 0
    %212 = vmatpush1.bf16.xpose.msra.mxu0 0
    %213 = vmatprep.subr.bf16.mxu0 0
    %214 = vmatpush1.bf16.xpose.msra.mxu0 0
    %215 = vmatprep.mubr.bf16.mxu0 0
    %216 = vmatmul.mubr.bf16.gmra.mrb[0].mxu0 %v119
    %v217 = vpop.f32.mrb[0].mxu0
    %v218 = vadd.f32 0.0, %v217
    %v219 = vpop.f32.mrb[0].mxu0
    %v220 = vpop.f32.mrb[0].mxu0
    %v221 = vadd.f32 0.0, %v220
    %v222 = vpop.f32.mrb[0].mxu0
    %223 = vmatprep.mubr.bf16.mxu0 0
    %224 = vmatmul.mubr.bf16.gmra.mrb[0].mxu0 %v120
    %v225 = vpop.f32.mrb[0].mxu0
    %v226 = vadd.f32 0.0, %v225
    %v227 = vpop.f32.mrb[0].mxu0
    %v228 = vpop.f32.mrb[0].mxu0
    %v229 = vadd.f32 0.0, %v228
    %v230 = vpop.f32.mrb[0].mxu0
    %231 = vmatprep.mubr.bf16.mxu0 0
    %232 = vmatmul.mubr.bf16.gmra.mrb[0].mxu0 %v121
    %v233 = vpop.f32.mrb[0].mxu0
    %v234 = vadd.f32 0.0, %v233
    %v235 = vpop.f32.mrb[0].mxu0
    %v236 = vpop.f32.mrb[0].mxu0
    %v237 = vadd.f32 0.0, %v236
    %v238 = vpop.f32.mrb[0].mxu0
    %239 = vmatprep.mubr.bf16.mxu0 0
    %240 = vmatmul.mubr.bf16.gmra.mrb[0].mxu0 %v122
    %v241 = vpop.f32.mrb[0].mxu0
    %v242 = vadd.f32 0.0, %v241
    %v243 = vpop.f32.mrb[0].mxu0
    %v244 = vpop.f32.mrb[0].mxu0
    %v245 = vadd.f32 0.0, %v244
    %v246 = vpop.f32.mrb[0].mxu0
    %247 = vmatprep.mubr.bf16.mxu0 0
    %248 = vmatmul.mubr.bf16.gmra.mrb[0].mxu0 %v123
    %v249 = vpop.f32.mrb[0].mxu0
    %v250 = vadd.f32 0.0, %v249
    %v251 = vpop.f32.mrb[0].mxu0
    %v252 = vpop.f32.mrb[0].mxu0
    %v253 = vadd.f32 0.0, %v252
    %v254 = vpop.f32.mrb[0].mxu0
    %255 = vmatprep.mubr.bf16.mxu0 0
    %256 = vmatmul.mubr.bf16.gmra.mrb[0].mxu0 %v124
    %v257 = vpop.f32.mrb[0].mxu0
    %v258 = vadd.f32 0.0, %v257
    %v259 = vpop.f32.mrb[0].mxu0
    %v260 = vpop.f32.mrb[0].mxu0
    %v261 = vadd.f32 0.0, %v260
    %v262 = vpop.f32.mrb[0].mxu0
    %263 = vmatprep.mubr.bf16.mxu0 0
    %264 = vmatmul.mubr.bf16.gmra.mrb[0].mxu0 %v125
    %v265 = vpop.f32.mrb[0].mxu0
    %v266 = vadd.f32 0.0, %v265
    %v267 = vpop.f32.mrb[0].mxu0
    %v268 = vpop.f32.mrb[0].mxu0
    %v269 = vadd.f32 0.0, %v268
    %v270 = vpop.f32.mrb[0].mxu0
    %271 = vmatprep.mubr.bf16.mxu0 0
    %272 = vmatmul.mubr.bf16.gmra.mrb[0].mxu0 %v126
    %v273 = vpop.f32.mrb[0].mxu0
    %v274 = vadd.f32 0.0, %v273
    %v275 = vpop.f32.mrb[0].mxu0
    %v276 = vpop.f32.mrb[0].mxu0
    %v277 = vadd.f32 0.0, %v276
    %v278 = vpop.f32.mrb[0].mxu0
    %279 = vdwg.mxu0
    %v280 = vadd.f32 %v39, %v218
    %v281 = vadd.f32 %v40, %v221
    %v282 = vadd.f32 %v41, %v226
    %v283 = vadd.f32 %v42, %v229
    %v284 = vadd.f32 %v43, %v234
    %v285 = vadd.f32 %v44, %v237
    %v286 = vadd.f32 %v45, %v242
    %v287 = vadd.f32 %v46, %v245
    %v288 = vadd.f32 %v47, %v250
    %v289 = vadd.f32 %v48, %v253
    %v290 = vadd.f32 %v49, %v258
    %v291 = vadd.f32 %v50, %v261
    %v292 = vadd.f32 %v51, %v266
    %v293 = vadd.f32 %v52, %v269
    %v294 = vadd.f32 %v53, %v274
    %v295 = vadd.f32 %v54, %v277
    %296 = vst [vmem:[#allocation2] sm:$0xff] %v280
    %297 = vst [vmem:[#allocation2 + $0x8] sm:$0xff] %v281
    %298 = vst [vmem:[#allocation2 + $0x10] sm:$0xff] %v282
    %299 = vst [vmem:[#allocation2 + $0x18] sm:$0xff] %v283
    %300 = vst [vmem:[#allocation2 + $0x20] sm:$0xff] %v284
    %301 = vst [vmem:[#allocation2 + $0x28] sm:$0xff] %v285
    %302 = vst [vmem:[#allocation2 + $0x30] sm:$0xff] %v286
    %303 = vst [vmem:[#allocation2 + $0x38] sm:$0xff] %v287
    %304 = vst [vmem:[#allocation2 + $0x40] sm:$0xff] %v288
    %305 = vst [vmem:[#allocation2 + $0x48] sm:$0xff] %v289
    %306 = vst [vmem:[#allocation2 + $0x50] sm:$0xff] %v290
    %307 = vst [vmem:[#allocation2 + $0x58] sm:$0xff] %v291
    %308 = vst [vmem:[#allocation2 + $0x60] sm:$0xff] %v292
    %309 = vst [vmem:[#allocation2 + $0x68] sm:$0xff] %v293
    %310 = vst [vmem:[#allocation2 + $0x70] sm:$0xff] %v294
    %311 = vst [vmem:[#allocation2 + $0x78] sm:$0xff] %v295
    // Predicated region
    $region22: #{tpu_custom_call.1} parent=1 // pred_check
      %p312 = pneg %p19
    $region23: #{tpu_custom_call.1} parent=1 // pred_check_branch
      %314 = sbr.rel (%p312) target = $region25
    $region24: #{tpu_custom_call.1} parent=1 // pred_region
      %v315 = vld [vmem:[%s2] sm:$0xff]
      %v316 = vld [vmem:[%s2 + $0x8] sm:$0xff]
      %v317 = vld [vmem:[%s2 + $0x10] sm:$0xff]
      %v318 = vld [vmem:[%s2 + $0x18] sm:$0xff]
      %v319 = vld [vmem:[%s2 + $0x20] sm:$0xff]
      %v320 = vld [vmem:[%s2 + $0x28] sm:$0xff]
      %v321 = vld [vmem:[%s2 + $0x30] sm:$0xff]
      %v322 = vld [vmem:[%s2 + $0x38] sm:$0xff]
      %v323 = vld [vmem:[%s2 + $0x40] sm:$0xff]
      %v324 = vld [vmem:[%s2 + $0x48] sm:$0xff]
      %v325 = vld [vmem:[%s2 + $0x50] sm:$0xff]
      %v326 = vld [vmem:[%s2 + $0x58] sm:$0xff]
      %v327 = vld [vmem:[%s2 + $0x60] sm:$0xff]
      %v328 = vld [vmem:[%s2 + $0x68] sm:$0xff]
      %v329 = vld [vmem:[%s2 + $0x70] sm:$0xff]
      %v330 = vld [vmem:[%s2 + $0x78] sm:$0xff]
      %v331 = vld [vmem:[%s3] sm:$0x1]
      %333 = vset.pattern.permute.xlu0 0
      %334 = vperm.xlu0 %333, %v315
      %v335 = vpop.permute.xlu0 %334
      %338 = vset.pattern.permute.xlu0 0
      %339 = vperm.xlu0 %338, %v316
      %v340 = vpop.permute.xlu0 %339
      %343 = vset.pattern.permute.xlu0 0
      %344 = vperm.xlu0 %343, %v317
      %v345 = vpop.permute.xlu0 %344
      %348 = vset.pattern.permute.xlu0 0
      %349 = vperm.xlu0 %348, %v318
      %v350 = vpop.permute.xlu0 %349
      %353 = vset.pattern.permute.xlu0 0
      %354 = vperm.xlu0 %353, %v319
      %v355 = vpop.permute.xlu0 %354
      %358 = vset.pattern.permute.xlu0 0
      %359 = vperm.xlu0 %358, %v320
      %v360 = vpop.permute.xlu0 %359
      %363 = vset.pattern.permute.xlu0 0
      %364 = vperm.xlu0 %363, %v321
      %v365 = vpop.permute.xlu0 %364
      %368 = vset.pattern.permute.xlu0 0
      %369 = vperm.xlu0 %368, %v322
      %v370 = vpop.permute.xlu0 %369
      %373 = vset.pattern.permute.xlu0 0
      %374 = vperm.xlu0 %373, %v323
      %v375 = vpop.permute.xlu0 %374
      %378 = vset.pattern.permute.xlu0 0
      %379 = vperm.xlu0 %378, %v324
      %v380 = vpop.permute.xlu0 %379
      %383 = vset.pattern.permute.xlu0 0
      %384 = vperm.xlu0 %383, %v325
      %v385 = vpop.permute.xlu0 %384
      %388 = vset.pattern.permute.xlu0 0
      %389 = vperm.xlu0 %388, %v326
      %v390 = vpop.permute.xlu0 %389
      %393 = vset.pattern.permute.xlu0 0
      %394 = vperm.xlu0 %393, %v327
      %v395 = vpop.permute.xlu0 %394
      %398 = vset.pattern.permute.xlu0 0
      %399 = vperm.xlu0 %398, %v328
      %v400 = vpop.permute.xlu0 %399
      %403 = vset.pattern.permute.xlu0 0
      %404 = vperm.xlu0 %403, %v329
      %v405 = vpop.permute.xlu0 %404
      %408 = vset.pattern.permute.xlu0 0
      %409 = vperm.xlu0 %408, %v330
      %v410 = vpop.permute.xlu0 %409
      %v413 = vlaneseq
      %v414 = vshrl.u32 %v413, 7
      %v415 = vsub.s32 0, %v414
      %v416 = vrot.slane %v331, %v415
      %v418 = vadd.f32 %v335, %v416
      %v419 = vadd.f32 %v340, %v416
      %v420 = vadd.f32 %v345, %v416
      %v421 = vadd.f32 %v350, %v416
      %v422 = vadd.f32 %v355, %v416
      %v423 = vadd.f32 %v360, %v416
      %v424 = vadd.f32 %v365, %v416
      %v425 = vadd.f32 %v370, %v416
      %v426 = vadd.f32 %v375, %v416
      %v427 = vadd.f32 %v380, %v416
      %v428 = vadd.f32 %v385, %v416
      %v429 = vadd.f32 %v390, %v416
      %v430 = vadd.f32 %v395, %v416
      %v431 = vadd.f32 %v400, %v416
      %v432 = vadd.f32 %v405, %v416
      %v433 = vadd.f32 %v410, %v416
      %v434 = vld [vmem:[#allocation2] sm:$0xff]
      %v435 = vld [vmem:[#allocation2 + $0x8] sm:$0xff]
      %v436 = vld [vmem:[#allocation2 + $0x10] sm:$0xff]
      %v437 = vld [vmem:[#allocation2 + $0x18] sm:$0xff]
      %v438 = vld [vmem:[#allocation2 + $0x20] sm:$0xff]
      %v439 = vld [vmem:[#allocation2 + $0x28] sm:$0xff]
      %v440 = vld [vmem:[#allocation2 + $0x30] sm:$0xff]
      %v441 = vld [vmem:[#allocation2 + $0x38] sm:$0xff]
      %v442 = vld [vmem:[#allocation2 + $0x40] sm:$0xff]
      %v443 = vld [vmem:[#allocation2 + $0x48] sm:$0xff]
      %v444 = vld [vmem:[#allocation2 + $0x50] sm:$0xff]
      %v445 = vld [vmem:[#allocation2 + $0x58] sm:$0xff]
      %v446 = vld [vmem:[#allocation2 + $0x60] sm:$0xff]
      %v447 = vld [vmem:[#allocation2 + $0x68] sm:$0xff]
      %v448 = vld [vmem:[#allocation2 + $0x70] sm:$0xff]
      %v449 = vld [vmem:[#allocation2 + $0x78] sm:$0xff]
      %v450 = vmul.f32 %v434, 2.0
      %v451 = vmul.f32 %v435, 2.0
      %v452 = vmul.f32 %v436, 2.0
      %v453 = vmul.f32 %v437, 2.0
      %v454 = vmul.f32 %v438, 2.0
      %v455 = vmul.f32 %v439, 2.0
      %v456 = vmul.f32 %v440, 2.0
      %v457 = vmul.f32 %v441, 2.0
      %v458 = vmul.f32 %v442, 2.0
      %v459 = vmul.f32 %v443, 2.0
      %v460 = vmul.f32 %v444, 2.0
      %v461 = vmul.f32 %v445, 2.0
      %v462 = vmul.f32 %v446, 2.0
      %v463 = vmul.f32 %v447, 2.0
      %v464 = vmul.f32 %v448, 2.0
      %v465 = vmul.f32 %v449, 2.0
      %v466 = vsub.f32 %v418, %v450
      %v467 = vsub.f32 %v419, %v451
      %v468 = vsub.f32 %v420, %v452
      %v469 = vsub.f32 %v421, %v453
      %v470 = vsub.f32 %v422, %v454
      %v471 = vsub.f32 %v423, %v455
      %v472 = vsub.f32 %v424, %v456
      %v473 = vsub.f32 %v425, %v457
      %v474 = vsub.f32 %v426, %v458
      %v475 = vsub.f32 %v427, %v459
      %v476 = vsub.f32 %v428, %v460
      %v477 = vsub.f32 %v429, %v461
      %v478 = vsub.f32 %v430, %v462
      %v479 = vsub.f32 %v431, %v463
      %v480 = vsub.f32 %v432, %v464
      %v481 = vsub.f32 %v433, %v465
      %v482 = vadd.f32 %v466, 3.2e-11
      %v483 = vadd.f32 %v467, 3.2e-11
      %v484 = vadd.f32 %v468, 3.2e-11
      %v485 = vadd.f32 %v469, 3.2e-11
      %v486 = vadd.f32 %v470, 3.2e-11
      %v487 = vadd.f32 %v471, 3.2e-11
      %v488 = vadd.f32 %v472, 3.2e-11
      %v489 = vadd.f32 %v473, 3.2e-11
      %v490 = vadd.f32 %v474, 3.2e-11
      %v491 = vadd.f32 %v475, 3.2e-11
      %v492 = vadd.f32 %v476, 3.2e-11
      %v493 = vadd.f32 %v477, 3.2e-11
      %v494 = vadd.f32 %v478, 3.2e-11
      %v495 = vadd.f32 %v479, 3.2e-11
      %v496 = vadd.f32 %v480, 3.2e-11
      %v497 = vadd.f32 %v481, 3.2e-11
      %v498 = vmax.f32 %v482, 0.0
      %v499 = vmax.f32 %v483, 0.0
      %v500 = vmax.f32 %v484, 0.0
      %v501 = vmax.f32 %v485, 0.0
      %v502 = vmax.f32 %v486, 0.0
      %v503 = vmax.f32 %v487, 0.0
      %v504 = vmax.f32 %v488, 0.0
      %v505 = vmax.f32 %v489, 0.0
      %v506 = vmax.f32 %v490, 0.0
      %v507 = vmax.f32 %v491, 0.0
      %v508 = vmax.f32 %v492, 0.0
      %v509 = vmax.f32 %v493, 0.0
      %v510 = vmax.f32 %v494, 0.0
      %v511 = vmax.f32 %v495, 0.0
      %v512 = vmax.f32 %v496, 0.0
      %v513 = vmax.f32 %v497, 0.0
      %v514 = vrsqrt.pop %v498
      %v515 = vmul.f32 %v498, %v514
      %vm516 = vcmp.eq.f32.partialorder %v498, inf
      %v517 = vsel %vm516, %v498, %v515
      %vm518 = vcmp.eq.f32.partialorder %v498, 0.0
      %v519 = vand.u32 %v498, 2147483648
      %v520 = vsel %vm518, %v519, %v517
      %v521 = vrsqrt.pop %v499
      %v522 = vmul.f32 %v499, %v521
      %vm523 = vcmp.eq.f32.partialorder %v499, inf
      %v524 = vsel %vm523, %v499, %v522
      %vm525 = vcmp.eq.f32.partialorder %v499, 0.0
      %v526 = vand.u32 %v499, 2147483648
      %v527 = vsel %vm525, %v526, %v524
      %v528 = vrsqrt.pop %v500
      %v529 = vmul.f32 %v500, %v528
      %vm530 = vcmp.eq.f32.partialorder %v500, inf
      %v531 = vsel %vm530, %v500, %v529
      %vm532 = vcmp.eq.f32.partialorder %v500, 0.0
      %v533 = vand.u32 %v500, 2147483648
      %v534 = vsel %vm532, %v533, %v531
      %v535 = vrsqrt.pop %v501
      %v536 = vmul.f32 %v501, %v535
      %vm537 = vcmp.eq.f32.partialorder %v501, inf
      %v538 = vsel %vm537, %v501, %v536
      %vm539 = vcmp.eq.f32.partialorder %v501, 0.0
      %v540 = vand.u32 %v501, 2147483648
      %v541 = vsel %vm539, %v540, %v538
      %v542 = vrsqrt.pop %v502
      %v543 = vmul.f32 %v502, %v542
      %vm544 = vcmp.eq.f32.partialorder %v502, inf
      %v545 = vsel %vm544, %v502, %v543
      %vm546 = vcmp.eq.f32.partialorder %v502, 0.0
      %v547 = vand.u32 %v502, 2147483648
      %v548 = vsel %vm546, %v547, %v545
      %v549 = vrsqrt.pop %v503
      %v550 = vmul.f32 %v503, %v549
      %vm551 = vcmp.eq.f32.partialorder %v503, inf
      %v552 = vsel %vm551, %v503, %v550
      %vm553 = vcmp.eq.f32.partialorder %v503, 0.0
      %v554 = vand.u32 %v503, 2147483648
      %v555 = vsel %vm553, %v554, %v552
      %v556 = vrsqrt.pop %v504
      %v557 = vmul.f32 %v504, %v556
      %vm558 = vcmp.eq.f32.partialorder %v504, inf
      %v559 = vsel %vm558, %v504, %v557
      %vm560 = vcmp.eq.f32.partialorder %v504, 0.0
      %v561 = vand.u32 %v504, 2147483648
      %v562 = vsel %vm560, %v561, %v559
      %v563 = vrsqrt.pop %v505
      %v564 = vmul.f32 %v505, %v563
      %vm565 = vcmp.eq.f32.partialorder %v505, inf
      %v566 = vsel %vm565, %v505, %v564
      %vm567 = vcmp.eq.f32.partialorder %v505, 0.0
      %v568 = vand.u32 %v505, 2147483648
      %v569 = vsel %vm567, %v568, %v566
      %v570 = vrsqrt.pop %v506
      %v571 = vmul.f32 %v506, %v570
      %vm572 = vcmp.eq.f32.partialorder %v506, inf
      %v573 = vsel %vm572, %v506, %v571
      %vm574 = vcmp.eq.f32.partialorder %v506, 0.0
      %v575 = vand.u32 %v506, 2147483648
      %v576 = vsel %vm574, %v575, %v573
      %v577 = vrsqrt.pop %v507
      %v578 = vmul.f32 %v507, %v577
      %vm579 = vcmp.eq.f32.partialorder %v507, inf
      %v580 = vsel %vm579, %v507, %v578
      %vm581 = vcmp.eq.f32.partialorder %v507, 0.0
      %v582 = vand.u32 %v507, 2147483648
      %v583 = vsel %vm581, %v582, %v580
      %v584 = vrsqrt.pop %v508
      %v585 = vmul.f32 %v508, %v584
      %vm586 = vcmp.eq.f32.partialorder %v508, inf
      %v587 = vsel %vm586, %v508, %v585
      %vm588 = vcmp.eq.f32.partialorder %v508, 0.0
      %v589 = vand.u32 %v508, 2147483648
      %v590 = vsel %vm588, %v589, %v587
      %v591 = vrsqrt.pop %v509
      %v592 = vmul.f32 %v509, %v591
      %vm593 = vcmp.eq.f32.partialorder %v509, inf
      %v594 = vsel %vm593, %v509, %v592
      %vm595 = vcmp.eq.f32.partialorder %v509, 0.0
      %v596 = vand.u32 %v509, 2147483648
      %v597 = vsel %vm595, %v596, %v594
      %v598 = vrsqrt.pop %v510
      %v599 = vmul.f32 %v510, %v598
      %vm600 = vcmp.eq.f32.partialorder %v510, inf
      %v601 = vsel %vm600, %v510, %v599
      %vm602 = vcmp.eq.f32.partialorder %v510, 0.0
      %v603 = vand.u32 %v510, 2147483648
      %v604 = vsel %vm602, %v603, %v601
      %v605 = vrsqrt.pop %v511
      %v606 = vmul.f32 %v511, %v605
      %vm607 = vcmp.eq.f32.partialorder %v511, inf
      %v608 = vsel %vm607, %v511, %v606
      %vm609 = vcmp.eq.f32.partialorder %v511, 0.0
      %v610 = vand.u32 %v511, 2147483648
      %v611 = vsel %vm609, %v610, %v608
      %v612 = vrsqrt.pop %v512
      %v613 = vmul.f32 %v512, %v612
      %vm614 = vcmp.eq.f32.partialorder %v512, inf
      %v615 = vsel %vm614, %v512, %v613
      %vm616 = vcmp.eq.f32.partialorder %v512, 0.0
      %v617 = vand.u32 %v512, 2147483648
      %v618 = vsel %vm616, %v617, %v615
      %v619 = vrsqrt.pop %v513
      %v620 = vmul.f32 %v513, %v619
      %vm621 = vcmp.eq.f32.partialorder %v513, inf
      %v622 = vsel %vm621, %v513, %v620
      %vm623 = vcmp.eq.f32.partialorder %v513, 0.0
      %v624 = vand.u32 %v513, 2147483648
      %v625 = vsel %vm623, %v624, %v622
      %626 = vst [vmem:[#allocation2] sm:$0xff] %v520
      %627 = vst [vmem:[#allocation2 + $0x8] sm:$0xff] %v527
      %628 = vst [vmem:[#allocation2 + $0x10] sm:$0xff] %v534
      %629 = vst [vmem:[#allocation2 + $0x18] sm:$0xff] %v541
      %630 = vst [vmem:[#allocation2 + $0x20] sm:$0xff] %v548
      %631 = vst [vmem:[#allocation2 + $0x28] sm:$0xff] %v555
      %632 = vst [vmem:[#allocation2 + $0x30] sm:$0xff] %v562
      %633 = vst [vmem:[#allocation2 + $0x38] sm:$0xff] %v569
      %634 = vst [vmem:[#allocation2 + $0x40] sm:$0xff] %v576
      %635 = vst [vmem:[#allocation2 + $0x48] sm:$0xff] %v583
      %636 = vst [vmem:[#allocation2 + $0x50] sm:$0xff] %v590
      %637 = vst [vmem:[#allocation2 + $0x58] sm:$0xff] %v597
      %638 = vst [vmem:[#allocation2 + $0x60] sm:$0xff] %v604
      %639 = vst [vmem:[#allocation2 + $0x68] sm:$0xff] %v611
      %640 = vst [vmem:[#allocation2 + $0x70] sm:$0xff] %v618
      %641 = vst [vmem:[#allocation2 + $0x78] sm:$0xff] %v625
    $region25: #{tpu_custom_call.1} parent=1 // pred_fallthru
      _
    // Predicated region
    $region26: #{tpu_custom_call.1} parent=1 // pred_check
      _
    $region27: #{tpu_custom_call.1} parent=1 // pred_check_branch
      %643 = sbr.rel (0) target = $region29
    $region28: #{tpu_custom_call.1} parent=1 // pred_region
      %s645 = ssub.s32 2048, 2048
      %646 = vsyncadd [#allocation3], %s645
      %s647 = sshll.u32 [#allocation2], 4
      %s648 = int_to_ptr.vmem [resolvable:$true] %s647
      %653 = dma.vmem_to_hbm [thread:$0]  %s648, 2048, %s4, [#allocation3], 128, 128, 8
    $region29: #{tpu_custom_call.1} parent=1 // pred_fallthru
      _
    // Predicated region
    $region30: #{tpu_custom_call.1} parent=1 // pred_check
      _
    $region31: #{tpu_custom_call.1} parent=1 // pred_check_branch
      %655 = sbr.rel (0) target = $region33
    $region32: #{tpu_custom_call.1} parent=1 // pred_region
      %656 = dma.done [#allocation3], 2048
    $region33: #{tpu_custom_call.1} parent=1 // pred_fallthru
      _
    %657 = vsyncpa [#allocation3], 1

</llo_original>
